<compile_context>
chip_gen: v7x
topology: tpu7x:2x2x1
jax: 0.10.0
libtpu: 0.0.40
codegen_flags: <defaults>
</compile_context>

<pallas_src>
import functools

import numpy as np

import jax
import jax.numpy as jnp
from jax.experimental import pallas as pl
from jax.experimental.pallas import tpu as pltpu

_SUBLANE = 8            # f32 sublane granularity for batch tiling
_TM_CAP = 2048          # batch-tile cap (multiple of 8); ~0.5 MB/input tile in f32
_MIN_PALLAS_ROWS = 1024 # below this, a plain fused XLA dot wins (launch-bound)


def _round_up(x, m):
    return ((x + m - 1) // m) * m


def _pick_tm(batch):
    # Aim for >= 2 grid tiles (v7x has 2 TensorCores) while capping tile size so
    # double-buffered VMEM stays tiny and step overhead is amortized.
    tm = _round_up(pl.cdiv(batch, 2), _SUBLANE)
    return max(_SUBLANE, min(_TM_CAP, tm))


def _fused_linear_kwargs_kernel(k1_ref, k2_ref, wt_ref, b2_ref, out_ref):
    # k1+k2 in f32 (no-op casts when inputs are already f32; keeps v5e off bf16
    # VPU ops when bf16 inputs are used), then cast to the MXU operand dtype.
    x = (k1_ref[...].astype(jnp.float32) + k2_ref[...].astype(jnp.float32))
    x = x.astype(wt_ref.dtype)                                   # [tm, input_dim]
    y = jnp.dot(x, wt_ref[...], preferred_element_type=jnp.float32)  # [tm, out]
    # Bias is (1, out): per-tile sublane broadcast — cheap, XLU has slack here.
    out_ref[...] = (y + b2_ref[...]).astype(out_ref.dtype)


@functools.partial(jax.jit, static_argnames=("tm",))
def _linear_kwargs_pallas(k1, k2, wt, b2, *, tm):
    batch, input_dim = k1.shape
    n_out = wt.shape[1]
    grid = (pl.cdiv(batch, tm),)  # ragged last tile handled by masked writeback

    return pl.pallas_call(
        _fused_linear_kwargs_kernel,
        out_shape=jax.ShapeDtypeStruct((batch, n_out), jnp.float32),
        grid_spec=pltpu.PrefetchScalarGridSpec(
            num_scalar_prefetch=0,
            grid=grid,
            in_specs=[
                pl.BlockSpec((tm, input_dim), lambda i: (i, 0)),        # k1 tile
                pl.BlockSpec((tm, input_dim), lambda i: (i, 0)),        # k2 tile
                pl.BlockSpec((input_dim, n_out), lambda i: (0, 0)),     # W^T resident
                pl.BlockSpec((1, n_out), lambda i: (0, 0)),             # 2*b resident
            ],
            out_specs=pl.BlockSpec((tm, n_out), lambda i: (i, 0)),      # compact output
        ),
        compiler_params=pltpu.CompilerParams(
            # Batch tiles are independent -> shards across v7x's 2 TCs;
            # harmless on single-TC v5e/v6e.
            dimension_semantics=("parallel",)),
    )(k1, k2, wt, b2)


@jax.jit
def _linear_kwargs_xla(k1, k2, wt, b2):
    # Small-batch fast path: one fused XLA dot, no custom-call launch overhead.
    x = k1.astype(jnp.float32) + k2.astype(jnp.float32)
    return jnp.dot(x, wt.astype(jnp.float32),
                   preferred_element_type=jnp.float32) + b2


def make_linear_kwargs_predictor(weight, bias, *, activation_dtype=jnp.float32,
                                 min_pallas_rows=_MIN_PALLAS_ROWS):
    """One-time parameter prep; returns the forward callable.

    weight: [output_dim, input_dim] (PyTorch nn.Linear layout), bias: [output_dim].
    activation_dtype: set to jnp.bfloat16 to halve input HBM traffic on large
    batches (accumulation stays f32; small numerics delta vs. the f32 reference).
    """
    weight = jnp.asarray(weight, jnp.float32)
    bias = jnp.asarray(bias, jnp.float32)
    output_dim, input_dim = weight.shape
    wt = weight.T.astype(activation_dtype)              # [input_dim, output_dim]
    b2 = (2.0 * bias).reshape(1, output_dim)            # pre-doubled bias, f32

    def forward(k1, k2, prediction_param_array, prediction_param_bool,
                *, force_pallas=False):
        # Non-batchable "prediction params": host-side validation only, mirroring
        # the PyTorch module's raises before the linear layer runs.
        if not bool(prediction_param_bool):
            raise ValueError('Expected prediction_param_bool to be True')
        if not np.all(np.asarray(prediction_param_array)):
            raise ValueError('Expected prediction_param_array to be all True')

        k1c = jnp.asarray(k1, activation_dtype)
        k2c = jnp.asarray(k2, activation_dtype)
        batch = k1c.shape[0]

        if batch < min_pallas_rows and not force_pallas:
            return _linear_kwargs_xla(k1c, k2c, wt, b2)

        tm = _pick_tm(batch)
        return _linear_kwargs_pallas(k1c, k2c, wt, b2, tm=tm)

    return forward


if __name__ == "__main__":
    batch, input_dim, output_dim = 8, 32, 16

    key = jax.random.PRNGKey(0)
    k_k1, k_k2, k_w, k_b = jax.random.split(key, 4)

    k1 = jax.random.normal(k_k1, (batch, input_dim), dtype=jnp.float32)
    k2 = jax.random.normal(k_k2, (batch, input_dim), dtype=jnp.float32)

    # Deterministic synthetic parameters (nn.Linear shapes).
    weight = jax.random.normal(k_w, (output_dim, input_dim), dtype=jnp.float32) * 0.1
    bias = jax.random.normal(k_b, (output_dim,), dtype=jnp.float32) * 0.1

    # Non-batchable prediction params (host-side numpy flags).
    prediction_param_array = np.ones((4,), dtype=bool)
    prediction_param_bool = True

    forward = make_linear_kwargs_predictor(weight, bias)

    # 1) Pallas path at the small test shape (forced; auto-dispatch would pick
    #    the plain-XLA fast path here since it's launch-overhead bound).
    out = forward(k1, k2, prediction_param_array, prediction_param_bool,
                  force_pallas=True)
    out = jax.block_until_ready(out)
    ref = (k1 @ weight.T + bias) + (k2 @ weight.T + bias)
    assert out.shape == (batch, output_dim)
    assert jnp.allclose(out, ref, atol=1e-5, rtol=1e-5), "pallas mismatch vs reference"

    # 2) Auto-dispatch (small-batch XLA fast path).
    out_fast = jax.block_until_ready(
        forward(k1, k2, prediction_param_array, prediction_param_bool))
    assert jnp.allclose(out_fast, ref, atol=1e-5, rtol=1e-5), "fast path mismatch"

    # 3) Larger ragged batch through Pallas: exercises the masked last tile
    #    (no jnp.pad copies) and the 2-tile split for v7x's two TensorCores.
    batch2 = 200
    k1b = jax.random.normal(k_k1, (batch2, input_dim), dtype=jnp.float32)
    k2b = jax.random.normal(k_k2, (batch2, input_dim), dtype=jnp.float32)
    out2 = jax.block_until_ready(
        forward(k1b, k2b, prediction_param_array, prediction_param_bool,
                force_pallas=True))
    ref2 = (k1b @ weight.T + bias) + (k2b @ weight.T + bias)
    assert out2.shape == (batch2, output_dim)
    assert jnp.allclose(out2, ref2, atol=1e-5, rtol=1e-5), "ragged-batch mismatch"

    print("KERNEL_OK")
</pallas_src>

<mosaic_0001>
module attributes {stable_mosaic.version = 11 : i64} {
  func.func @_fused_linear_kwargs_kernel(%arg0: i32, %arg1: memref<8x32xf32, #tpu.memory_space<vmem>>, %arg2: memref<8x32xf32, #tpu.memory_space<vmem>>, %arg3: memref<32x16xf32, #tpu.memory_space<vmem>>, %arg4: memref<1x16xf32, #tpu.memory_space<vmem>>, %arg5: memref<8x16xf32, #tpu.memory_space<vmem>>) attributes {dimension_semantics = [#tpu.dimension_semantics<parallel>], iteration_bounds = array<i64: 1>, scalar_prefetch = 0 : i64, scratch_operands = 0 : i64, tpu.core_type = #tpu.core_type<tc>, window_params = [{transform_indices = @transform_0, window_bounds = array<i64: 8, 32>}, {transform_indices = @transform_1, window_bounds = array<i64: 8, 32>}, {pipeline_mode = #tpu.pipeline_mode<synchronous>, transform_indices = @transform_2, window_bounds = array<i64: 32, 16>}, {pipeline_mode = #tpu.pipeline_mode<synchronous>, transform_indices = @transform_3, window_bounds = array<i64: 1, 16>}, {transform_indices = @transform_4, window_bounds = array<i64: 8, 16>}]} {
    %c0 = arith.constant 0 : index
    %c0_0 = arith.constant 0 : index
    %0 = vector.load %arg1[%c0, %c0_0] : memref<8x32xf32, #tpu.memory_space<vmem>>, vector<8x32xf32>
    %c0_1 = arith.constant 0 : index
    %c0_2 = arith.constant 0 : index
    %1 = vector.load %arg2[%c0_1, %c0_2] : memref<8x32xf32, #tpu.memory_space<vmem>>, vector<8x32xf32>
    %2 = arith.addf %0, %1 : vector<8x32xf32>
    %c0_3 = arith.constant 0 : index
    %c0_4 = arith.constant 0 : index
    %3 = vector.load %arg3[%c0_3, %c0_4] : memref<32x16xf32, #tpu.memory_space<vmem>>, vector<32x16xf32>
    %cst = arith.constant dense<0.000000e+00> : vector<8x16xf32>
    %4 = tpu.matmul %2, %3, %cst {dimension_numbers = #tpu.dot_dimension_numbers<[1], [0], [0], [1], [0, 0, 1, 1], [], []>} : vector<8x32xf32>, vector<32x16xf32>, vector<8x16xf32> -> vector<8x16xf32>
    %c0_5 = arith.constant 0 : index
    %c0_6 = arith.constant 0 : index
    %5 = vector.load %arg4[%c0_5, %c0_6] : memref<1x16xf32, #tpu.memory_space<vmem>>, vector<1x16xf32>
    %6 = vector.broadcast %5 : vector<1x16xf32> to vector<8x16xf32>
    %7 = arith.addf %4, %6 : vector<8x16xf32>
    %c0_7 = arith.constant 0 : index
    %c0_8 = arith.constant 0 : index
    %8 = vector.load %arg5[%c0_7, %c0_8] : memref<8x16xf32, #tpu.memory_space<vmem>>, vector<8x16xf32>
    tpu.vector_store %arg5[%c0_7, %c0_8], %7 {strides = array<i32>} : memref<8x16xf32, #tpu.memory_space<vmem>>, vector<8x16xf32>,
    return
  }
  func.func @transform_0(%arg0: i32) -> (i32, i32) {
    %c0_i32 = arith.constant 0 : i32
    %c0_i32_0 = arith.constant 0 : i32
    return %arg0, %c0_i32 : i32, i32
  }
  func.func @transform_1(%arg0: i32) -> (i32, i32) {
    %c0_i32 = arith.constant 0 : i32
    %c0_i32_0 = arith.constant 0 : i32
    return %arg0, %c0_i32 : i32, i32
  }
  func.func @transform_2(%arg0: i32) -> (i32, i32) {
    %c0_i32 = arith.constant 0 : i32
    %c0_i32_0 = arith.constant 0 : i32
    %c0_i32_1 = arith.constant 0 : i32
    return %c0_i32, %c0_i32_0 : i32, i32
  }
  func.func @transform_3(%arg0: i32) -> (i32, i32) {
    %c0_i32 = arith.constant 0 : i32
    %c0_i32_0 = arith.constant 0 : i32
    %c0_i32_1 = arith.constant 0 : i32
    return %c0_i32, %c0_i32_0 : i32, i32
  }
  func.func @transform_4(%arg0: i32) -> (i32, i32) {
    %c0_i32 = arith.constant 0 : i32
    %c0_i32_0 = arith.constant 0 : i32
    return %arg0, %c0_i32 : i32, i32
  }
}

</mosaic_0001>

<llo_original>
// kernel: _linear_kwargs_pallas.1
$region0: #{_linear_kwargs_pallas.1}
  #allocation0 [shape = 'u32[]', space=smem, size = 0x4, offset = 0x4, fixed_abs, tag = 'smem constant byte address 0x4 - core index']
  #allocation1 [shape = 'u32[144,128]{1,0:T(1,128)}', space=vmem, size = 0x12000, scoped, tag = 'internal scratch']
  %s0 = inlined_call_operand.vmem [shape: f32[8,32], index: 0, kind: input, shape index: {}]
  %s1 = inlined_call_operand.vmem [shape: f32[8,32], index: 1, kind: input, shape index: {}]
  %s2 = inlined_call_operand.vmem [shape: f32[32,16], index: 2, kind: input, shape index: {}]
  %s3 = inlined_call_operand.vmem [shape: f32[1,16], index: 3, kind: input, shape index: {}]
  %s4 = inlined_call_operand.hbm [shape: f32[8,16], index: 4, kind: output, shape index: {}]
  %s5 = sld [smem:[#allocation0]]
  $region26: #{_linear_kwargs_pallas.1} parent=0
    _
  %s7 = ssub.s32 1, %s5
  %s8 = scalar_select 0, %s7, %s5
  $region1: #{_linear_kwargs_pallas.1} parent=0
    #allocation2 [shape = 'u8[4096]{0}', space=vmem, size = 0x1000, scoped, tag = 'output window, operand 0, single buffered']
    #allocation3 [shape = 's32[1]{0}', space=sflag, size = 0x4, scoped, tag = 'scoped memory for _linear_kwargs_pallas.1']
    %9 = vsyncpa [#allocation3], 0
    // Predicated region
    $region2: #{_linear_kwargs_pallas.1} parent=1 // pred_check
      _
    $region3: #{_linear_kwargs_pallas.1} parent=1 // pred_check_branch
      %11 = sbr.rel (0) target = $region5
    $region4: #{_linear_kwargs_pallas.1} parent=1 // pred_region
      _
    $region5: #{_linear_kwargs_pallas.1} parent=1 // pred_fallthru
      _
    // Predicated region
    $region6: #{_linear_kwargs_pallas.1} parent=1 // pred_check
      _
    $region7: #{_linear_kwargs_pallas.1} parent=1 // pred_check_branch
      %13 = sbr.rel (0) target = $region9
    $region8: #{_linear_kwargs_pallas.1} parent=1 // pred_region
      _
    $region9: #{_linear_kwargs_pallas.1} parent=1 // pred_fallthru
      _
    // Predicated region
    $region10: #{_linear_kwargs_pallas.1} parent=1 // pred_check
      _
    $region11: #{_linear_kwargs_pallas.1} parent=1 // pred_check_branch
      %15 = sbr.rel (0) target = $region13
    $region12: #{_linear_kwargs_pallas.1} parent=1 // pred_region
      _
    $region13: #{_linear_kwargs_pallas.1} parent=1 // pred_fallthru
      _
    // Predicated region
    $region14: #{_linear_kwargs_pallas.1} parent=1 // pred_check
      _
    $region15: #{_linear_kwargs_pallas.1} parent=1 // pred_check_branch
      %17 = sbr.rel (0) target = $region17
    $region16: #{_linear_kwargs_pallas.1} parent=1 // pred_region
      _
    $region17: #{_linear_kwargs_pallas.1} parent=1 // pred_fallthru
      _
    %v18 = vld [vmem:[%s0] sm:$0xff]
    %v19 = vld [vmem:[%s1] sm:$0xff]
    %v20 = vadd.f32 %v18, %v19
    %v21 = vld [vmem:[%s2] sm:$0xff]
    %v22 = vld [vmem:[%s2 + $0x8] sm:$0xff]
    %v23 = vld [vmem:[%s2 + $0x10] sm:$0xff]
    %v24 = vld [vmem:[%s2 + $0x18] sm:$0xff]
    %v25 = vld [vmem:[%s3] sm:$0x1]
    %v27 = vlaneseq
    %v28 = vshrl.u32 %v27, 7
    %v29 = vsub.s32 0, %v28
    %v30 = vrot.slane %v25, %v29
    %vm32 = vcmask 261120
    %v34 = vsel %vm32, %v20, 0
    %36 = vmatprep.subr.mxu0 0.0
    %37 = vmatpush1.msra.mxu0 %v21
    %38 = vmatprep.subr.mxu0 0.0
    %39 = vmatpush1.msra.mxu0 %v22
    %40 = vmatprep.subr.mxu0 0.0
    %41 = vmatpush1.msra.mxu0 %v23
    %42 = vmatprep.subr.mxu0 0.0
    %43 = vmatpush1.msra.mxu0 %v24
    %44 = vmatprep.subr.mxu0 0.0
    %45 = vmatpush1.msra.mxu0 0.0
    %46 = vmatprep.subr.mxu0 0.0
    %47 = vmatpush1.msra.mxu0 0.0
    %48 = vmatprep.subr.mxu0 0.0
    %49 = vmatpush1.msra.mxu0 0.0
    %50 = vmatprep.subr.mxu0 0.0
    %51 = vmatpush1.msra.mxu0 0.0
    %52 = vmatprep.subr.mxu0 0.0
    %53 = vmatpush1.msra.mxu0 0.0
    %54 = vmatprep.subr.mxu0 0.0
    %55 = vmatpush1.msra.mxu0 0.0
    %56 = vmatprep.subr.mxu0 0.0
    %57 = vmatpush1.msra.mxu0 0.0
    %58 = vmatprep.subr.mxu0 0.0
    %59 = vmatpush1.msra.mxu0 0.0
    %60 = vmatprep.subr.mxu0 0.0
    %61 = vmatpush1.msra.mxu0 0.0
    %62 = vmatprep.subr.mxu0 0.0
    %63 = vmatpush1.msra.mxu0 0.0
    %64 = vmatprep.subr.mxu0 0.0
    %65 = vmatpush1.msra.mxu0 0.0
    %66 = vmatprep.subr.mxu0 0.0
    %67 = vmatpush1.msra.mxu0 0.0
    %68 = vmatprep.subr.mxu0 0.0
    %69 = vmatpush1.msra.mxu0 0.0
    %70 = vmatprep.subr.mxu0 0.0
    %71 = vmatpush1.msra.mxu0 0.0
    %72 = vmatprep.subr.mxu0 0.0
    %73 = vmatpush1.msra.mxu0 0.0
    %74 = vmatprep.subr.mxu0 0.0
    %75 = vmatpush1.msra.mxu0 0.0
    %76 = vmatprep.subr.mxu0 0.0
    %77 = vmatpush1.msra.mxu0 0.0
    %78 = vmatprep.subr.mxu0 0.0
    %79 = vmatpush1.msra.mxu0 0.0
    %80 = vmatprep.subr.mxu0 0.0
    %81 = vmatpush1.msra.mxu0 0.0
    %82 = vmatprep.subr.mxu0 0.0
    %83 = vmatpush1.msra.mxu0 0.0
    %84 = vmatprep.subr.mxu0 0.0
    %85 = vmatpush1.msra.mxu0 0.0
    %86 = vmatprep.subr.mxu0 0.0
    %87 = vmatpush1.msra.mxu0 0.0
    %88 = vmatprep.subr.mxu0 0.0
    %89 = vmatpush1.msra.mxu0 0.0
    %90 = vmatprep.subr.mxu0 0.0
    %91 = vmatpush1.msra.mxu0 0.0
    %92 = vmatprep.subr.mxu0 0.0
    %93 = vmatpush1.msra.mxu0 0.0
    %94 = vmatprep.subr.mxu0 0.0
    %95 = vmatpush1.msra.mxu0 0.0
    %96 = vmatprep.subr.mxu0 0.0
    %97 = vmatpush1.msra.mxu0 0.0
    %98 = vmatprep.subr.mxu0 0.0
    %99 = vmatpush1.msra.mxu0 0.0
    %100 = vmatprep.mubr.f32.mxu0 0.0
    %101 = vmatmul.mubr.f32.gmra.mrb[0].mxu0 %v34
    %v102 = vpop.f32.mrb[0].mxu0
    %v103 = vadd.f32 %v30, %v102
    %v104 = vpop.f32.mrb[0].mxu0
    %105 = vdwg.mxu0
    %vm106 = vcmask 130048
    %107 = vst.msk [vmem:[#allocation2] sm:$0xff] %vm106, %v103
    // Predicated region
    $region18: #{_linear_kwargs_pallas.1} parent=1 // pred_check
      _
    $region19: #{_linear_kwargs_pallas.1} parent=1 // pred_check_branch
      %109 = sbr.rel (0) target = $region21
    $region20: #{_linear_kwargs_pallas.1} parent=1 // pred_region
      %s111 = ssub.s32 128, 128
      %112 = vsyncadd [#allocation3], %s111
      %s114 = sshll.u32 [#allocation2], 4
      %s115 = int_to_ptr.vmem [resolvable:$true] %s114
      %117 = dma.vmem_to_hbm [thread:$0]  %s115, 128, %s4, [#allocation3]
    $region21: #{_linear_kwargs_pallas.1} parent=1 // pred_fallthru
      _
    // Predicated region
    $region22: #{_linear_kwargs_pallas.1} parent=1 // pred_check
      _
    $region23: #{_linear_kwargs_pallas.1} parent=1 // pred_check_branch
      %119 = sbr.rel (0) target = $region25
    $region24: #{_linear_kwargs_pallas.1} parent=1 // pred_region
      %120 = dma.done [#allocation3], 128
    $region25: #{_linear_kwargs_pallas.1} parent=1 // pred_fallthru
      _
    %121 = vsyncpa [#allocation3], 1

</llo_original>
